<compile_context>
chip_gen: v7x
topology: tpu7x:2x2x1
jax: 0.10.0
libtpu: 0.0.40
codegen_flags: <defaults>
</compile_context>

<pallas_src>
import jax
import jax.numpy as jnp
from jax.experimental import pallas as pl
from jax.experimental.pallas import tpu as pltpu


def _round_up(a, m):
    return (a + m - 1) // m * m


def _cdiv(a, b):
    return -(-a // b)


def mlp_kernel(x_ref, w1_ref, b1_ref, w2_ref, b2_ref, w3_ref, b3_ref, o_ref):
    # Cast the f32 input tile to bf16 for the MXU; accumulate in f32.
    x = x_ref[...].astype(jnp.bfloat16)
    # Layer 1: Linear(n_in, 256) + ReLU
    h1 = jnp.dot(x, w1_ref[...], preferred_element_type=jnp.float32) + b1_ref[...]
    h1 = jnp.maximum(h1, 0.0).astype(jnp.bfloat16)
    # Layer 2: Linear(256, 128) + ReLU
    h2 = jnp.dot(h1, w2_ref[...], preferred_element_type=jnp.float32) + b2_ref[...]
    h2 = jnp.maximum(h2, 0.0).astype(jnp.bfloat16)
    # Layer 3: Linear(128, n_out)
    out = jnp.dot(h2, w3_ref[...], preferred_element_type=jnp.float32) + b3_ref[...]
    o_ref[...] = out.astype(o_ref.dtype)


def mlp_pallas(x, params, *, tile_b=2048):
    """x: (B, n_in) f32.  params: (w1, b1, w2, b2, w3, b3) with w stored (in, out)."""
    w1, b1, w2, b2, w3, b3 = params
    B, n_in = x.shape
    H1 = w1.shape[1]          # 256
    H2 = w2.shape[1]          # 128
    n_out = w3.shape[1]

    # Batch tile: multiple of 16 (bf16 sublane tile); keep >=2 grid steps for
    # mid/large batches so v7x's two TensorCores both get work.
    TILE_B = min(tile_b, _round_up(_cdiv(B, 2), 16))
    TILE_B = max(TILE_B, 16)

    if B < TILE_B:
        # Tiny batch: a single block; pad rows so block_shape <= array shape.
        x_in = jnp.zeros((TILE_B, n_in), x.dtype).at[:B].set(x)
        B_eff = TILE_B
    else:
        # Large/ragged batches: no padding; Pallas clips the ragged last block.
        x_in = x
        B_eff = B
    grid = (_cdiv(B_eff, TILE_B),)

    # Pre-cast the (small) weights once; biases stay f32 for the epilogue.
    w1_b = w1.astype(jnp.bfloat16)
    w2_b = w2.astype(jnp.bfloat16)
    w3_b = w3.astype(jnp.bfloat16)
    b1_r = b1.reshape(1, H1).astype(jnp.float32)
    b2_r = b2.reshape(1, H2).astype(jnp.float32)
    b3_r = b3.reshape(1, n_out).astype(jnp.float32)

    flops = 2 * B_eff * (n_in * H1 + H1 * H2 + H2 * n_out)
    bytes_accessed = (B_eff * n_in * 4 + B_eff * n_out * 4
                      + (n_in * H1 + H1 * H2 + H2 * n_out) * 2
                      + (H1 + H2 + n_out) * 4)

    out = pl.pallas_call(
        mlp_kernel,
        out_shape=jax.ShapeDtypeStruct((B_eff, n_out), jnp.float32),
        grid=grid,
        in_specs=[
            pl.BlockSpec((TILE_B, n_in), lambda i: (i, 0)),   # x  (tiled over batch, unpadded cols)
            pl.BlockSpec((n_in, H1),     lambda i: (0, 0)),   # w1 (VMEM-resident)
            pl.BlockSpec((1, H1),        lambda i: (0, 0)),   # b1
            pl.BlockSpec((H1, H2),       lambda i: (0, 0)),   # w2
            pl.BlockSpec((1, H2),        lambda i: (0, 0)),   # b2
            pl.BlockSpec((H2, n_out),    lambda i: (0, 0)),   # w3
            pl.BlockSpec((1, n_out),     lambda i: (0, 0)),   # b3
        ],
        out_specs=pl.BlockSpec((TILE_B, n_out), lambda i: (i, 0)),
        compiler_params=pltpu.CompilerParams(
            dimension_semantics=("parallel",),
            vmem_limit_bytes=32 * 1024 * 1024,
        ),
        cost_estimate=pl.CostEstimate(
            flops=flops, transcendentals=0, bytes_accessed=bytes_accessed),
    )(x_in, w1_b, b1_r, w2_b, b2_r, w3_b, b3_r)

    # Only the tiny-batch path padded rows; large batches come back exact.
    return out[:B] if B_eff != B else out


def init_linear(key, fan_in, fan_out):
    # Deterministic init mimicking nn.Linear default (uniform +/- 1/sqrt(fan_in)),
    # stored transposed ((in, out)) so the kernel computes x @ W + b.
    kw, kb = jax.random.split(key)
    bound = 1.0 / jnp.sqrt(fan_in)
    w = jax.random.uniform(kw, (fan_in, fan_out), jnp.float32, -bound, bound)
    b = jax.random.uniform(kb, (fan_out,), jnp.float32, -bound, bound)
    return w, b


def mlp_reference_f32(x, params):
    w1, b1, w2, b2, w3, b3 = params
    h1 = jnp.maximum(x @ w1 + b1, 0.0)
    h2 = jnp.maximum(h1 @ w2 + b2, 0.0)
    return h2 @ w3 + b3


def mlp_reference_bf16(x, params):
    # Mirrors the kernel's precision path (bf16 MXU inputs, f32 accumulation).
    w1, b1, w2, b2, w3, b3 = params
    xb = x.astype(jnp.bfloat16)
    h1 = jnp.dot(xb, w1.astype(jnp.bfloat16), preferred_element_type=jnp.float32) + b1
    h1 = jnp.maximum(h1, 0.0).astype(jnp.bfloat16)
    h2 = jnp.dot(h1, w2.astype(jnp.bfloat16), preferred_element_type=jnp.float32) + b2
    h2 = jnp.maximum(h2, 0.0).astype(jnp.bfloat16)
    return jnp.dot(h2, w3.astype(jnp.bfloat16), preferred_element_type=jnp.float32) + b3


if __name__ == "__main__":
    n_inputs, n_outputs = 32, 16

    key = jax.random.PRNGKey(0)
    kx, k1, k2, k3, kx2 = jax.random.split(key, 5)

    w1, b1 = init_linear(k1, n_inputs, 256)
    w2, b2 = init_linear(k2, 256, 128)
    w3, b3 = init_linear(k3, 128, n_outputs)
    params = (w1, b1, w2, b2, w3, b3)

    # --- Tiny-batch path (single tile, minimal row pad) ---
    batch = 8
    x = jax.random.normal(kx, (batch, n_inputs), jnp.float32)
    out = jax.block_until_ready(mlp_pallas(x, params))
    assert out.shape == (batch, n_outputs)
    assert jnp.allclose(out, mlp_reference_bf16(x, params), atol=2e-3, rtol=2e-3), \
        "mismatch vs bf16-path reference (small batch)"
    assert jnp.allclose(out, mlp_reference_f32(x, params), atol=5e-2, rtol=5e-2), \
        "mismatch vs f32 reference (small batch)"

    # --- Multi-step ragged path (grid > 1, clipped last block, no batch pad) ---
    batch2 = 520
    x2 = jax.random.normal(kx2, (batch2, n_inputs), jnp.float32)
    out2 = jax.block_until_ready(mlp_pallas(x2, params))       # default tile_b
    assert out2.shape == (batch2, n_outputs)
    assert jnp.allclose(out2, mlp_reference_bf16(x2, params), atol=2e-3, rtol=2e-3), \
        "mismatch vs bf16-path reference (tiled batch)"
    assert jnp.allclose(out2, mlp_reference_f32(x2, params), atol=5e-2, rtol=5e-2), \
        "mismatch vs f32 reference (tiled batch)"

    # Same batch with a small explicit tile (3 grid steps, ragged last block).
    out3 = jax.block_until_ready(mlp_pallas(x2, params, tile_b=256))
    assert out3.shape == (batch2, n_outputs)
    assert jnp.allclose(out3, mlp_reference_bf16(x2, params), atol=2e-3, rtol=2e-3), \
        "mismatch vs bf16-path reference (small-tile batch)"

    print("KERNEL_OK")
</pallas_src>

<mosaic_0001>
module attributes {stable_mosaic.version = 11 : i64} {
  func.func @mlp_kernel(%arg0: i32, %arg1: memref<16x32xf32, #tpu.memory_space<vmem>>, %arg2: memref<32x256xbf16, #tpu.memory_space<vmem>>, %arg3: memref<1x256xf32, #tpu.memory_space<vmem>>, %arg4: memref<256x128xbf16, #tpu.memory_space<vmem>>, %arg5: memref<1x128xf32, #tpu.memory_space<vmem>>, %arg6: memref<128x16xbf16, #tpu.memory_space<vmem>>, %arg7: memref<1x16xf32, #tpu.memory_space<vmem>>, %arg8: memref<16x16xf32, #tpu.memory_space<vmem>>) attributes {dimension_semantics = [#tpu.dimension_semantics<parallel>], iteration_bounds = array<i64: 1>, scalar_prefetch = 0 : i64, scratch_operands = 0 : i64, tpu.core_type = #tpu.core_type<tc>, window_params = [{transform_indices = @transform_0, window_bounds = array<i64: 16, 32>}, {pipeline_mode = #tpu.pipeline_mode<synchronous>, transform_indices = @transform_1, window_bounds = array<i64: 32, 256>}, {pipeline_mode = #tpu.pipeline_mode<synchronous>, transform_indices = @transform_2, window_bounds = array<i64: 1, 256>}, {pipeline_mode = #tpu.pipeline_mode<synchronous>, transform_indices = @transform_3, window_bounds = array<i64: 256, 128>}, {pipeline_mode = #tpu.pipeline_mode<synchronous>, transform_indices = @transform_4, window_bounds = array<i64: 1, 128>}, {pipeline_mode = #tpu.pipeline_mode<synchronous>, transform_indices = @transform_5, window_bounds = array<i64: 128, 16>}, {pipeline_mode = #tpu.pipeline_mode<synchronous>, transform_indices = @transform_6, window_bounds = array<i64: 1, 16>}, {transform_indices = @transform_7, window_bounds = array<i64: 16, 16>}]} {
    %c0 = arith.constant 0 : index
    %c0_0 = arith.constant 0 : index
    %0 = vector.load %arg1[%c0, %c0_0] : memref<16x32xf32, #tpu.memory_space<vmem>>, vector<16x32xf32>
    %1 = arith.truncf %0 : vector<16x32xf32> to vector<16x32xbf16>
    %c0_1 = arith.constant 0 : index
    %c0_2 = arith.constant 0 : index
    %2 = vector.load %arg2[%c0_1, %c0_2] : memref<32x256xbf16, #tpu.memory_space<vmem>>, vector<32x256xbf16>
    %cst = arith.constant dense<0.000000e+00> : vector<16x256xf32>
    %3 = tpu.matmul %1, %2, %cst {dimension_numbers = #tpu.dot_dimension_numbers<[1], [0], [0], [1], [0, 0, 1, 1], [], []>} : vector<16x32xbf16>, vector<32x256xbf16>, vector<16x256xf32> -> vector<16x256xf32>
    %c0_3 = arith.constant 0 : index
    %c0_4 = arith.constant 0 : index
    %4 = vector.load %arg3[%c0_3, %c0_4] : memref<1x256xf32, #tpu.memory_space<vmem>>, vector<1x256xf32>
    %5 = vector.broadcast %4 : vector<1x256xf32> to vector<16x256xf32>
    %6 = arith.addf %3, %5 : vector<16x256xf32>
    %cst_5 = arith.constant 0.000000e+00 : f32
    %7 = vector.broadcast %cst_5 : f32 to vector<16x256xf32>
    %8 = arith.maximumf %6, %7 : vector<16x256xf32>
    %9 = arith.truncf %8 : vector<16x256xf32> to vector<16x256xbf16>
    %c0_6 = arith.constant 0 : index
    %c0_7 = arith.constant 0 : index
    %10 = vector.load %arg4[%c0_6, %c0_7] : memref<256x128xbf16, #tpu.memory_space<vmem>>, vector<256x128xbf16>
    %cst_8 = arith.constant dense<0.000000e+00> : vector<16x128xf32>
    %11 = tpu.matmul %9, %10, %cst_8 {dimension_numbers = #tpu.dot_dimension_numbers<[1], [0], [0], [1], [0, 0, 1, 1], [], []>} : vector<16x256xbf16>, vector<256x128xbf16>, vector<16x128xf32> -> vector<16x128xf32>
    %c0_9 = arith.constant 0 : index
    %c0_10 = arith.constant 0 : index
    %12 = vector.load %arg5[%c0_9, %c0_10] : memref<1x128xf32, #tpu.memory_space<vmem>>, vector<1x128xf32>
    %13 = vector.broadcast %12 : vector<1x128xf32> to vector<16x128xf32>
    %14 = arith.addf %11, %13 : vector<16x128xf32>
    %cst_11 = arith.constant 0.000000e+00 : f32
    %15 = vector.broadcast %cst_11 : f32 to vector<16x128xf32>
    %16 = arith.maximumf %14, %15 : vector<16x128xf32>
    %17 = arith.truncf %16 : vector<16x128xf32> to vector<16x128xbf16>
    %c0_12 = arith.constant 0 : index
    %c0_13 = arith.constant 0 : index
    %18 = vector.load %arg6[%c0_12, %c0_13] : memref<128x16xbf16, #tpu.memory_space<vmem>>, vector<128x16xbf16>
    %cst_14 = arith.constant dense<0.000000e+00> : vector<16x16xf32>
    %19 = tpu.matmul %17, %18, %cst_14 {dimension_numbers = #tpu.dot_dimension_numbers<[1], [0], [0], [1], [0, 0, 1, 1], [], []>} : vector<16x128xbf16>, vector<128x16xbf16>, vector<16x16xf32> -> vector<16x16xf32>
    %c0_15 = arith.constant 0 : index
    %c0_16 = arith.constant 0 : index
    %20 = vector.load %arg7[%c0_15, %c0_16] : memref<1x16xf32, #tpu.memory_space<vmem>>, vector<1x16xf32>
    %21 = vector.broadcast %20 : vector<1x16xf32> to vector<16x16xf32>
    %22 = arith.addf %19, %21 : vector<16x16xf32>
    %c0_17 = arith.constant 0 : index
    %c0_18 = arith.constant 0 : index
    %23 = vector.load %arg8[%c0_17, %c0_18] : memref<16x16xf32, #tpu.memory_space<vmem>>, vector<16x16xf32>
    tpu.vector_store %arg8[%c0_17, %c0_18], %22 {strides = array<i32>} : memref<16x16xf32, #tpu.memory_space<vmem>>, vector<16x16xf32>,
    return
  }
  func.func @transform_0(%arg0: i32) -> (i32, i32) {
    %c0_i32 = arith.constant 0 : i32
    %c0_i32_0 = arith.constant 0 : i32
    return %arg0, %c0_i32 : i32, i32
  }
  func.func @transform_1(%arg0: i32) -> (i32, i32) {
    %c0_i32 = arith.constant 0 : i32
    %c0_i32_0 = arith.constant 0 : i32
    %c0_i32_1 = arith.constant 0 : i32
    return %c0_i32, %c0_i32_0 : i32, i32
  }
  func.func @transform_2(%arg0: i32) -> (i32, i32) {
    %c0_i32 = arith.constant 0 : i32
    %c0_i32_0 = arith.constant 0 : i32
    %c0_i32_1 = arith.constant 0 : i32
    return %c0_i32, %c0_i32_0 : i32, i32
  }
  func.func @transform_3(%arg0: i32) -> (i32, i32) {
    %c0_i32 = arith.constant 0 : i32
    %c0_i32_0 = arith.constant 0 : i32
    %c0_i32_1 = arith.constant 0 : i32
    return %c0_i32, %c0_i32_0 : i32, i32
  }
  func.func @transform_4(%arg0: i32) -> (i32, i32) {
    %c0_i32 = arith.constant 0 : i32
    %c0_i32_0 = arith.constant 0 : i32
    %c0_i32_1 = arith.constant 0 : i32
    return %c0_i32, %c0_i32_0 : i32, i32
  }
  func.func @transform_5(%arg0: i32) -> (i32, i32) {
    %c0_i32 = arith.constant 0 : i32
    %c0_i32_0 = arith.constant 0 : i32
    %c0_i32_1 = arith.constant 0 : i32
    return %c0_i32, %c0_i32_0 : i32, i32
  }
  func.func @transform_6(%arg0: i32) -> (i32, i32) {
    %c0_i32 = arith.constant 0 : i32
    %c0_i32_0 = arith.constant 0 : i32
    %c0_i32_1 = arith.constant 0 : i32
    return %c0_i32, %c0_i32_0 : i32, i32
  }
  func.func @transform_7(%arg0: i32) -> (i32, i32) {
    %c0_i32 = arith.constant 0 : i32
    %c0_i32_0 = arith.constant 0 : i32
    return %arg0, %c0_i32 : i32, i32
  }
}

</mosaic_0001>

<llo_original>
// kernel: tpu_custom_call.1
$region0: #{tpu_custom_call.1}
  #allocation0 [shape = 'u32[]', space=smem, size = 0x4, offset = 0x4, fixed_abs, tag = 'smem constant byte address 0x4 - core index']
  #allocation1 [shape = 'u32[144,128]{1,0:T(1,128)}', space=vmem, size = 0x12000, scoped, tag = 'internal scratch']
  %s0 = inlined_call_operand.vmem [shape: f32[16,32], index: 0, kind: input, shape index: {}]
  %s1 = inlined_call_operand.vmem [shape: bf16[32,256], index: 1, kind: input, shape index: {}]
  %s2 = inlined_call_operand.vmem [shape: f32[1,256], index: 2, kind: input, shape index: {}]
  %s3 = inlined_call_operand.hbm [shape: bf16[256,128], index: 3, kind: input, shape index: {}]
  %s4 = inlined_call_operand.vmem [shape: f32[1,128], index: 4, kind: input, shape index: {}]
  %s5 = inlined_call_operand.vmem [shape: bf16[128,16], index: 5, kind: input, shape index: {}]
  %s6 = inlined_call_operand.vmem [shape: f32[1,16], index: 6, kind: input, shape index: {}]
  %s7 = inlined_call_operand.hbm [shape: f32[16,16], index: 7, kind: output, shape index: {}]
  %s8 = sld [smem:[#allocation0]]
  $region42: #{tpu_custom_call.1} parent=0
    _
  %s10 = ssub.s32 1, %s8
  %s11 = scalar_select 0, %s10, %s8
  $region1: #{tpu_custom_call.1} parent=0
    #allocation2 [shape = 'u8[65536]{0}', space=vmem, size = 0x10000, scoped, tag = 'input window, operand 3, single buffered']
    #allocation3 [shape = 's32[1]{0}', space=sflag, size = 0x4, scoped, tag = 'scoped memory for tpu_custom_call.1']
    #allocation4 [shape = 's32[1]{0}', space=sflag, size = 0x4, scoped, tag = 'scoped memory for tpu_custom_call.1']
    #allocation5 [shape = 'u8[8192]{0}', space=vmem, size = 0x2000, scoped, tag = 'output window, operand 0, single buffered']
    %12 = vsyncpa [#allocation3], 0
    %13 = vsyncpa [#allocation4], 0
    // Predicated region
    $region2: #{tpu_custom_call.1} parent=1 // pred_check
      _
    $region3: #{tpu_custom_call.1} parent=1 // pred_check_branch
      %15 = sbr.rel (0) target = $region5
    $region4: #{tpu_custom_call.1} parent=1 // pred_region
      _
    $region5: #{tpu_custom_call.1} parent=1 // pred_fallthru
      _
    // Predicated region
    $region6: #{tpu_custom_call.1} parent=1 // pred_check
      _
    $region7: #{tpu_custom_call.1} parent=1 // pred_check_branch
      %17 = sbr.rel (0) target = $region9
    $region8: #{tpu_custom_call.1} parent=1 // pred_region
      _
    $region9: #{tpu_custom_call.1} parent=1 // pred_fallthru
      _
    // Predicated region
    $region10: #{tpu_custom_call.1} parent=1 // pred_check
      _
    $region11: #{tpu_custom_call.1} parent=1 // pred_check_branch
      %19 = sbr.rel (0) target = $region13
    $region12: #{tpu_custom_call.1} parent=1 // pred_region
      _
    $region13: #{tpu_custom_call.1} parent=1 // pred_fallthru
      _
    // Predicated region
    $region14: #{tpu_custom_call.1} parent=1 // pred_check
      _
    $region15: #{tpu_custom_call.1} parent=1 // pred_check_branch
      %21 = sbr.rel (0) target = $region17
    $region16: #{tpu_custom_call.1} parent=1 // pred_region
      %s23 = ssub.s32 2048, 2048
      %24 = vsyncadd [#allocation3], %s23
      %s25 = sshll.u32 [#allocation2], 4
      %s26 = int_to_ptr.vmem [resolvable:$true] %s25
      %31 = dma.hbm_to_vmem [thread:$0]  %s3, 2048, %s26, [#allocation3], 64, 64, 4
    $region17: #{tpu_custom_call.1} parent=1 // pred_fallthru
      _
    // Predicated region
    $region18: #{tpu_custom_call.1} parent=1 // pred_check
      _
    $region19: #{tpu_custom_call.1} parent=1 // pred_check_branch
      %33 = sbr.rel (0) target = $region21
    $region20: #{tpu_custom_call.1} parent=1 // pred_region
      _
    $region21: #{tpu_custom_call.1} parent=1 // pred_fallthru
      _
    // Predicated region
    $region22: #{tpu_custom_call.1} parent=1 // pred_check
      _
    $region23: #{tpu_custom_call.1} parent=1 // pred_check_branch
      %35 = sbr.rel (0) target = $region25
    $region24: #{tpu_custom_call.1} parent=1 // pred_region
      _
    $region25: #{tpu_custom_call.1} parent=1 // pred_fallthru
      _
    // Predicated region
    $region26: #{tpu_custom_call.1} parent=1 // pred_check
      _
    $region27: #{tpu_custom_call.1} parent=1 // pred_check_branch
      %37 = sbr.rel (0) target = $region29
    $region28: #{tpu_custom_call.1} parent=1 // pred_region
      _
    $region29: #{tpu_custom_call.1} parent=1 // pred_fallthru
      _
    // Predicated region
    $region30: #{tpu_custom_call.1} parent=1 // pred_check
      _
    $region31: #{tpu_custom_call.1} parent=1 // pred_check_branch
      %39 = sbr.rel (0) target = $region33
    $region32: #{tpu_custom_call.1} parent=1 // pred_region
      %40 = dma.done [#allocation3], 2048
    $region33: #{tpu_custom_call.1} parent=1 // pred_fallthru
      _
    %v42 = vld [vmem:[%s0] sm:$0xff]
    %v43 = vld [vmem:[%s0 + $0x8] sm:$0xff]
    %v44 = vpack.c.bf16 %v43, %v42
    %v45 = vld [vmem:[%s1] sm:$0xff]
    %v46 = vld [vmem:[%s1 + $0x8] sm:$0xff]
    %v47 = vld [vmem:[%s1 + $0x10] sm:$0xff]
    %v48 = vld [vmem:[%s1 + $0x18] sm:$0xff]
    %v49 = vld [vmem:[%s2] sm:$0x3]
    %v51 = vlaneseq
    %v52 = vshrl.u32 %v51, 7
    %v53 = vsub.s32 0, %v52
    %v54 = vrot.slane %v49, %v53
    %v55 = vlaneseq
    %v56 = vshrl.u32 %v55, 7
    %v57 = vsub.s32 1, %v56
    %v58 = vrot.slane %v49, %v57
    %v65 = vunpack.c.l.b16 %v45
    %v66 = vunpack.c.h.b16 %v45
    %v67 = vunpack.c.l.b16 %v46
    %v68 = vunpack.c.h.b16 %v46
    %v69 = vunpack.c.l.b16 %v47
    %v70 = vunpack.c.h.b16 %v47
    %v71 = vunpack.c.l.b16 %v48
    %v72 = vunpack.c.h.b16 %v48
    %v73 = vpack.c.b16 %v67, %v65
    %v74 = vpack.c.b16 %v68, %v66
    %v75 = vpack.c.b16 %v71, %v69
    %v76 = vpack.c.b16 %v72, %v70
    %vm81 = vcmask 261120
    %v83 = vsel %vm81, %v44, 0
    %85 = vmatprep.subr.bf16.mxu0 %v74
    %86 = vmatpush1.bf16.msra.mxu0 %v73
    %87 = vmatprep.subr.bf16.mxu0 %v76
    %88 = vmatpush1.bf16.msra.mxu0 %v75
    %89 = vmatprep.subr.bf16.mxu0 0
    %90 = vmatpush1.bf16.msra.mxu0 0
    %91 = vmatprep.subr.bf16.mxu0 0
    %92 = vmatpush1.bf16.msra.mxu0 0
    %93 = vmatprep.subr.bf16.mxu0 0
    %94 = vmatpush1.bf16.msra.mxu0 0
    %95 = vmatprep.subr.bf16.mxu0 0
    %96 = vmatpush1.bf16.msra.mxu0 0
    %97 = vmatprep.subr.bf16.mxu0 0
    %98 = vmatpush1.bf16.msra.mxu0 0
    %99 = vmatprep.subr.bf16.mxu0 0
    %100 = vmatpush1.bf16.msra.mxu0 0
    %101 = vmatprep.subr.bf16.mxu0 0
    %102 = vmatpush1.bf16.msra.mxu0 0
    %103 = vmatprep.subr.bf16.mxu0 0
    %104 = vmatpush1.bf16.msra.mxu0 0
    %105 = vmatprep.subr.bf16.mxu0 0
    %106 = vmatpush1.bf16.msra.mxu0 0
    %107 = vmatprep.subr.bf16.mxu0 0
    %108 = vmatpush1.bf16.msra.mxu0 0
    %109 = vmatprep.subr.bf16.mxu0 0
    %110 = vmatpush1.bf16.msra.mxu0 0
    %111 = vmatprep.subr.bf16.mxu0 0
    %112 = vmatpush1.bf16.msra.mxu0 0
    %113 = vmatprep.subr.bf16.mxu0 0
    %114 = vmatpush1.bf16.msra.mxu0 0
    %115 = vmatprep.subr.bf16.mxu0 0
    %116 = vmatpush1.bf16.msra.mxu0 0
    %117 = vmatprep.mubr.bf16.mxu0 0
    %118 = vmatmul.mubr.bf16.gmra.mrb[0].mxu0 %v83
    %v119 = vpop.f32.mrb[0].mxu0
    %v120 = vadd.f32 %v54, %v119
    %v121 = vpop.f32.mrb[0].mxu0
    %v122 = vadd.f32 %v58, %v121
    %v123 = vpop.f32.mrb[0].mxu0
    %v124 = vadd.f32 %v54, %v123
    %v125 = vpop.f32.mrb[0].mxu0
    %v126 = vadd.f32 %v58, %v125
    %127 = vdwg.mxu0
    %v128 = vmax.f32 %v120, 0.0
    %v129 = vmax.f32 %v122, 0.0
    %v130 = vmax.f32 %v124, 0.0
    %v131 = vmax.f32 %v126, 0.0
    %v132 = vpack.c.bf16 %v130, %v128
    %v133 = vpack.c.bf16 %v131, %v129
    %v134 = vld [vmem:[#allocation2] sm:$0xf]
    %v135 = vld [vmem:[#allocation2 + $0x4] sm:$0xf]
    %v136 = vld [vmem:[#allocation2 + $0x8] sm:$0xf]
    %v137 = vld [vmem:[#allocation2 + $0xc] sm:$0xf]
    %v138 = vld [vmem:[#allocation2 + $0x10] sm:$0xf]
    %v139 = vld [vmem:[#allocation2 + $0x14] sm:$0xf]
    %v140 = vld [vmem:[#allocation2 + $0x18] sm:$0xf]
    %v141 = vld [vmem:[#allocation2 + $0x1c] sm:$0xf]
    %v142 = vld [vmem:[#allocation2 + $0x20] sm:$0xf]
    %v143 = vld [vmem:[#allocation2 + $0x24] sm:$0xf]
    %v144 = vld [vmem:[#allocation2 + $0x28] sm:$0xf]
    %v145 = vld [vmem:[#allocation2 + $0x2c] sm:$0xf]
    %v146 = vld [vmem:[#allocation2 + $0x30] sm:$0xf]
    %v147 = vld [vmem:[#allocation2 + $0x34] sm:$0xf]
    %v148 = vld [vmem:[#allocation2 + $0x38] sm:$0xf]
    %v149 = vld [vmem:[#allocation2 + $0x3c] sm:$0xf]
    %v150 = vld [vmem:[#allocation2 + $0x40] sm:$0xf]
    %v151 = vld [vmem:[#allocation2 + $0x44] sm:$0xf]
    %v152 = vld [vmem:[#allocation2 + $0x48] sm:$0xf]
    %v153 = vld [vmem:[#allocation2 + $0x4c] sm:$0xf]
    %v154 = vld [vmem:[#allocation2 + $0x50] sm:$0xf]
    %v155 = vld [vmem:[#allocation2 + $0x54] sm:$0xf]
    %v156 = vld [vmem:[#allocation2 + $0x58] sm:$0xf]
    %v157 = vld [vmem:[#allocation2 + $0x5c] sm:$0xf]
    %v158 = vld [vmem:[#allocation2 + $0x60] sm:$0xf]
    %v159 = vld [vmem:[#allocation2 + $0x64] sm:$0xf]
    %v160 = vld [vmem:[#allocation2 + $0x68] sm:$0xf]
    %v161 = vld [vmem:[#allocation2 + $0x6c] sm:$0xf]
    %v162 = vld [vmem:[#allocation2 + $0x70] sm:$0xf]
    %v163 = vld [vmem:[#allocation2 + $0x74] sm:$0xf]
    %v164 = vld [vmem:[#allocation2 + $0x78] sm:$0xf]
    %v165 = vld [vmem:[#allocation2 + $0x7c] sm:$0xf]
    %v166 = vld [vmem:[%s4] sm:$0x1]
    %v168 = vlaneseq
    %v169 = vshrl.u32 %v168, 7
    %v170 = vsub.s32 0, %v169
    %v171 = vrot.slane %v166, %v170
    %v205 = vunpack.c.l.b16 %v134
    %v206 = vunpack.c.l.b16 %v135
    %v207 = vunpack.c.l.b16 %v136
    %v208 = vunpack.c.l.b16 %v137
    %v209 = vunpack.c.l.b16 %v138
    %v210 = vunpack.c.l.b16 %v139
    %v211 = vunpack.c.l.b16 %v140
    %v212 = vunpack.c.l.b16 %v141
    %v213 = vunpack.c.l.b16 %v142
    %v214 = vunpack.c.l.b16 %v143
    %v215 = vunpack.c.l.b16 %v144
    %v216 = vunpack.c.l.b16 %v145
    %v217 = vunpack.c.l.b16 %v146
    %v218 = vunpack.c.l.b16 %v147
    %v219 = vunpack.c.l.b16 %v148
    %v220 = vunpack.c.l.b16 %v149
    %v221 = vunpack.c.l.b16 %v150
    %v222 = vunpack.c.l.b16 %v151
    %v223 = vunpack.c.l.b16 %v152
    %v224 = vunpack.c.l.b16 %v153
    %v225 = vunpack.c.l.b16 %v154
    %v226 = vunpack.c.l.b16 %v155
    %v227 = vunpack.c.l.b16 %v156
    %v228 = vunpack.c.l.b16 %v157
    %v229 = vunpack.c.l.b16 %v158
    %v230 = vunpack.c.l.b16 %v159
    %v231 = vunpack.c.l.b16 %v160
    %v232 = vunpack.c.l.b16 %v161
    %v233 = vunpack.c.l.b16 %v162
    %v234 = vunpack.c.l.b16 %v163
    %v235 = vunpack.c.l.b16 %v164
    %v236 = vunpack.c.l.b16 %v165
    %v237 = vpack.c.b16 %v206, %v205
    %v238 = vpack.c.b16 %v208, %v207
    %v239 = vpack.c.b16 %v210, %v209
    %v240 = vpack.c.b16 %v212, %v211
    %v241 = vpack.c.b16 %v214, %v213
    %v242 = vpack.c.b16 %v216, %v215
    %v243 = vpack.c.b16 %v218, %v217
    %v244 = vpack.c.b16 %v220, %v219
    %v245 = vpack.c.b16 %v222, %v221
    %v246 = vpack.c.b16 %v224, %v223
    %v247 = vpack.c.b16 %v226, %v225
    %v248 = vpack.c.b16 %v228, %v227
    %v249 = vpack.c.b16 %v230, %v229
    %v250 = vpack.c.b16 %v232, %v231
    %v251 = vpack.c.b16 %v234, %v233
    %v252 = vpack.c.b16 %v236, %v235
    %269 = vmatprep.subr.bf16.mxu0 0
    %270 = vmatpush1.bf16.msra.mxu0 %v237
    %271 = vmatprep.subr.bf16.mxu0 0
    %272 = vmatpush1.bf16.msra.mxu0 %v238
    %273 = vmatprep.subr.bf16.mxu0 0
    %274 = vmatpush1.bf16.msra.mxu0 %v239
    %275 = vmatprep.subr.bf16.mxu0 0
    %276 = vmatpush1.bf16.msra.mxu0 %v240
    %277 = vmatprep.subr.bf16.mxu0 0
    %278 = vmatpush1.bf16.msra.mxu0 %v241
    %279 = vmatprep.subr.bf16.mxu0 0
    %280 = vmatpush1.bf16.msra.mxu0 %v242
    %281 = vmatprep.subr.bf16.mxu0 0
    %282 = vmatpush1.bf16.msra.mxu0 %v243
    %283 = vmatprep.subr.bf16.mxu0 0
    %284 = vmatpush1.bf16.msra.mxu0 %v244
    %285 = vmatprep.subr.bf16.mxu0 0
    %286 = vmatpush1.bf16.msra.mxu0 %v245
    %287 = vmatprep.subr.bf16.mxu0 0
    %288 = vmatpush1.bf16.msra.mxu0 %v246
    %289 = vmatprep.subr.bf16.mxu0 0
    %290 = vmatpush1.bf16.msra.mxu0 %v247
    %291 = vmatprep.subr.bf16.mxu0 0
    %292 = vmatpush1.bf16.msra.mxu0 %v248
    %293 = vmatprep.subr.bf16.mxu0 0
    %294 = vmatpush1.bf16.msra.mxu0 %v249
    %295 = vmatprep.subr.bf16.mxu0 0
    %296 = vmatpush1.bf16.msra.mxu0 %v250
    %297 = vmatprep.subr.bf16.mxu0 0
    %298 = vmatpush1.bf16.msra.mxu0 %v251
    %299 = vmatprep.subr.bf16.mxu0 0
    %300 = vmatpush1.bf16.msra.mxu0 %v252
    %301 = vmatprep.mubr.bf16.mxu0 %v133
    %302 = vmatmul.mubr.bf16.gmra.mrb[0].mxu0 %v132
    %v303 = vpop.f32.mrb[0].mxu0
    %v304 = vadd.f32 %v171, %v303
    %v305 = vpop.f32.mrb[0].mxu0
    %v306 = vpop.f32.mrb[0].mxu0
    %v307 = vadd.f32 %v171, %v306
    %v308 = vpop.f32.mrb[0].mxu0
    %309 = vdwg.mxu0
    %v310 = vmax.f32 %v304, 0.0
    %v311 = vmax.f32 %v307, 0.0
    %v312 = vpack.c.bf16 %v311, %v310
    %v313 = vld [vmem:[%s5] sm:$0xf]
    %v314 = vld [vmem:[%s5 + $0x4] sm:$0xf]
    %v315 = vld [vmem:[%s5 + $0x8] sm:$0xf]
    %v316 = vld [vmem:[%s5 + $0xc] sm:$0xf]
    %v317 = vld [vmem:[%s5 + $0x10] sm:$0xf]
    %v318 = vld [vmem:[%s5 + $0x14] sm:$0xf]
    %v319 = vld [vmem:[%s5 + $0x18] sm:$0xf]
    %v320 = vld [vmem:[%s5 + $0x1c] sm:$0xf]
    %v321 = vld [vmem:[%s5 + $0x20] sm:$0xf]
    %v322 = vld [vmem:[%s5 + $0x24] sm:$0xf]
    %v323 = vld [vmem:[%s5 + $0x28] sm:$0xf]
    %v324 = vld [vmem:[%s5 + $0x2c] sm:$0xf]
    %v325 = vld [vmem:[%s5 + $0x30] sm:$0xf]
    %v326 = vld [vmem:[%s5 + $0x34] sm:$0xf]
    %v327 = vld [vmem:[%s5 + $0x38] sm:$0xf]
    %v328 = vld [vmem:[%s5 + $0x3c] sm:$0xf]
    %v329 = vld [vmem:[%s6] sm:$0x1]
    %v331 = vlaneseq
    %v332 = vshrl.u32 %v331, 7
    %v333 = vsub.s32 0, %v332
    %v334 = vrot.slane %v329, %v333
    %v352 = vunpack.c.l.b16 %v313
    %v353 = vunpack.c.l.b16 %v314
    %v354 = vunpack.c.l.b16 %v315
    %v355 = vunpack.c.l.b16 %v316
    %v356 = vunpack.c.l.b16 %v317
    %v357 = vunpack.c.l.b16 %v318
    %v358 = vunpack.c.l.b16 %v319
    %v359 = vunpack.c.l.b16 %v320
    %v360 = vunpack.c.l.b16 %v321
    %v361 = vunpack.c.l.b16 %v322
    %v362 = vunpack.c.l.b16 %v323
    %v363 = vunpack.c.l.b16 %v324
    %v364 = vunpack.c.l.b16 %v325
    %v365 = vunpack.c.l.b16 %v326
    %v366 = vunpack.c.l.b16 %v327
    %v367 = vunpack.c.l.b16 %v328
    %v368 = vpack.c.b16 %v353, %v352
    %v369 = vpack.c.b16 %v355, %v354
    %v370 = vpack.c.b16 %v357, %v356
    %v371 = vpack.c.b16 %v359, %v358
    %v372 = vpack.c.b16 %v361, %v360
    %v373 = vpack.c.b16 %v363, %v362
    %v374 = vpack.c.b16 %v365, %v364
    %v375 = vpack.c.b16 %v367, %v366
    %384 = vmatprep.subr.bf16.mxu0 0
    %385 = vmatpush1.bf16.msra.mxu0 %v368
    %386 = vmatprep.subr.bf16.mxu0 0
    %387 = vmatpush1.bf16.msra.mxu0 %v369
    %388 = vmatprep.subr.bf16.mxu0 0
    %389 = vmatpush1.bf16.msra.mxu0 %v370
    %390 = vmatprep.subr.bf16.mxu0 0
    %391 = vmatpush1.bf16.msra.mxu0 %v371
    %392 = vmatprep.subr.bf16.mxu0 0
    %393 = vmatpush1.bf16.msra.mxu0 %v372
    %394 = vmatprep.subr.bf16.mxu0 0
    %395 = vmatpush1.bf16.msra.mxu0 %v373
    %396 = vmatprep.subr.bf16.mxu0 0
    %397 = vmatpush1.bf16.msra.mxu0 %v374
    %398 = vmatprep.subr.bf16.mxu0 0
    %399 = vmatpush1.bf16.msra.mxu0 %v375
    %400 = vmatprep.subr.bf16.mxu0 0
    %401 = vmatpush1.bf16.msra.mxu0 0
    %402 = vmatprep.subr.bf16.mxu0 0
    %403 = vmatpush1.bf16.msra.mxu0 0
    %404 = vmatprep.subr.bf16.mxu0 0
    %405 = vmatpush1.bf16.msra.mxu0 0
    %406 = vmatprep.subr.bf16.mxu0 0
    %407 = vmatpush1.bf16.msra.mxu0 0
    %408 = vmatprep.subr.bf16.mxu0 0
    %409 = vmatpush1.bf16.msra.mxu0 0
    %410 = vmatprep.subr.bf16.mxu0 0
    %411 = vmatpush1.bf16.msra.mxu0 0
    %412 = vmatprep.subr.bf16.mxu0 0
    %413 = vmatpush1.bf16.msra.mxu0 0
    %414 = vmatprep.subr.bf16.mxu0 0
    %415 = vmatpush1.bf16.msra.mxu0 0
    %416 = vmatprep.mubr.bf16.mxu0 0
    %417 = vmatmul.mubr.bf16.gmra.mrb[0].mxu0 %v312
    %v418 = vpop.f32.mrb[0].mxu0
    %v419 = vadd.f32 %v334, %v418
    %v420 = vpop.f32.mrb[0].mxu0
    %v421 = vpop.f32.mrb[0].mxu0
    %v422 = vadd.f32 %v334, %v421
    %v423 = vpop.f32.mrb[0].mxu0
    %424 = vdwg.mxu0
    %vm425 = vcmask 130048
    %426 = vst.msk [vmem:[#allocation5] sm:$0xff] %vm425, %v419
    %427 = vst.msk [vmem:[#allocation5 + $0x8] sm:$0xff] %vm425, %v422
    // Predicated region
    $region34: #{tpu_custom_call.1} parent=1 // pred_check
      _
    $region35: #{tpu_custom_call.1} parent=1 // pred_check_branch
      %429 = sbr.rel (0) target = $region37
    $region36: #{tpu_custom_call.1} parent=1 // pred_region
      %s431 = ssub.s32 256, 256
      %432 = vsyncadd [#allocation4], %s431
      %s433 = sshll.u32 [#allocation5], 4
      %s434 = int_to_ptr.vmem [resolvable:$true] %s433
      %439 = dma.vmem_to_hbm [thread:$0]  %s434, 256, %s7, [#allocation4], 128, 128, 8
    $region37: #{tpu_custom_call.1} parent=1 // pred_fallthru
      _
    // Predicated region
    $region38: #{tpu_custom_call.1} parent=1 // pred_check
      _
    $region39: #{tpu_custom_call.1} parent=1 // pred_check_branch
      %441 = sbr.rel (0) target = $region41
    $region40: #{tpu_custom_call.1} parent=1 // pred_region
      %442 = dma.done [#allocation4], 256
    $region41: #{tpu_custom_call.1} parent=1 // pred_fallthru
      _
    %443 = vsyncpa [#allocation3], 1
    %444 = vsyncpa [#allocation4], 1

</llo_original>
